<compile_context>
chip_gen: v6e
topology: v6e:2x2x1
jax: 0.10.0
libtpu: 0.0.40
codegen_flags: <defaults>
</compile_context>

<pallas_src>
import functools

import jax
import jax.numpy as jnp
from jax.experimental import pallas as pl
from jax.experimental.pallas import tpu as pltpu


def _lane_group_reduce(x, group, n_groups, op):
    """Reduce over `n_groups` lane-groups of width `group` (slot-major layout).

    x: (rows, n_groups*group).  Returns the same shape where every lane holds the
    op-reduction over the n_groups slots of its within-group position.  Circular
    rolls by multiples of `group` preserve the within-group offset, so the tree /
    chain of rolls covers all slots exactly.
    """
    total = n_groups * group
    if n_groups & (n_groups - 1) == 0:          # power of two: log2(n_groups) rolls
        shift = group
        while shift < total:
            x = op(x, pltpu.roll(x, shift, 1))
            shift *= 2
        return x
    acc = x
    cur = x
    for _ in range(n_groups - 1):               # general case: n_groups-1 rolls
        cur = pltpu.roll(cur, group, 1)
        acc = op(acc, cur)
    return acc


def _projected_softmax(score_ref, wbig_ref, bias_ref, S, H):
    # Linear(2->H) for all S slots in one small MXU matmul against the
    # block-diagonal kron(I_S, W); output is already lane-dense (bt, S*H).
    proj = jnp.dot(score_ref[...], wbig_ref[...],
                   preferred_element_type=jnp.float32) + bias_ref[...]
    proj = jnp.maximum(proj, 0.0)                                   # ReLU
    m = _lane_group_reduce(proj, H, S, jnp.maximum)                 # max over slots
    e = jnp.exp(proj - m)
    denom = _lane_group_reduce(e, H, S, jnp.add)                    # sum over slots
    return e, denom


def _spatial_attention_kernel(score_ref, hidden_ref, wbig_ref, bias_ref,
                              out_ref, weights_ref, *, S, H):
    e, denom = _projected_softmax(score_ref, wbig_ref, bias_ref, S, H)
    weights = e * pl.reciprocal(denom, approx=False)                # (bt, S*H)
    weights_ref[...] = weights                                      # lane-dense store
    summed = _lane_group_reduce(hidden_ref[...] * weights, H, S, jnp.add)
    out_ref[...] = summed[:, :H]                                    # slot-0 group holds full sum


def _spatial_attention_result_only_kernel(score_ref, hidden_ref, wbig_ref,
                                          bias_ref, out_ref, *, S, H):
    e, denom = _projected_softmax(score_ref, wbig_ref, bias_ref, S, H)
    num = _lane_group_reduce(hidden_ref[...] * e, H, S, jnp.add)
    out_ref[...] = num[:, :H] * pl.reciprocal(denom[:, :H], approx=False)


def _round_up(x, m):
    return ((x + m - 1) // m) * m


def _vmem_budget():
    """Generation-aware scoped-VMEM limit and per-call tiling budget."""
    cap = 64 * 1024 * 1024                      # conservative default = v7x VMEM per TC
    try:
        info = pltpu.get_tpu_info()
        cap = int(getattr(info, "vmem_capacity_bytes", cap)) or cap
    except Exception:
        pass
    vmem_limit = min((cap * 3) // 4, 100 * 1024 * 1024)   # ~48 MiB v7x, ~96 MiB v5e/v6e
    return vmem_limit, vmem_limit // 2                    # 50% margin for scratch/overheads


def _padded_row_bytes(S, H):
    """f32 VMEM bytes per batch row with 128-lane padding on every block /
    temporary: double-buffered in/out blocks + ~8 in-kernel slabs."""
    shp = _round_up(S * H, 128)     # hidden block, weights block, temporaries
    scp = _round_up(2 * S, 128)     # score block
    hp = _round_up(H, 128)          # atten_result block
    words = 2 * shp + 2 * scp + 2 * shp + 2 * hp + 8 * shp
    return 4 * words


def _pick_batch_tile(B, S, H, budget_bytes):
    per_row = _padded_row_bytes(S, H)
    bt = max(8, (budget_bytes // per_row) // 8 * 8)
    bt = min(bt, 1024)              # >=512-row tiles already reach ~85% of HBM roofline
    if B <= 8:
        return B                    # single block; dims equal the full array (legal)
    # Guarantee >=2 grid steps so v7x megacore sharding and DMA/compute overlap engage.
    bt = min(bt, _round_up(pl.cdiv(B, 2), 8))
    return max(8, bt)


def spatial_attention_net(hidden, score, w, b, *, return_weights=True):
    """JAX wrapper mirroring Spatial_AttentionNet.forward(hidden, score).

    hidden: (B, S, H), score: (B, S, 2), w: (2, H) (nn.Linear weight transposed
    to in x out), b: (H,).  Returns (atten_result, weights); with
    return_weights=False only atten_result is returned and the (B,S,H) weights
    writeback (≈ half the HBM traffic) is skipped.
    """
    B, S, H = hidden.shape
    assert score.shape == (B, S, 2)
    assert w.shape == (2, H)
    f32 = jnp.float32

    hidden_flat = jnp.asarray(hidden, f32).reshape(B, S * H)   # free row-major reshape
    score_flat = jnp.asarray(score, f32).reshape(B, S * 2)     # free row-major reshape
    w = jnp.asarray(w, f32)
    b = jnp.asarray(b, f32)
    # Block-diagonal projection weight: w_big[s*2 + k, s*H + h] = w[k, h].
    w_big = jnp.kron(jnp.eye(S, dtype=f32), w)                 # (2S, S*H), tiny
    bias_tiled = jnp.tile(b, S).reshape(1, S * H)

    vmem_limit, budget = _vmem_budget()
    bt = _pick_batch_tile(B, S, H, budget)
    grid = (pl.cdiv(B, bt),)

    in_specs = [
        pl.BlockSpec((bt, 2 * S), lambda i: (i, 0)),       # score (flattened)
        pl.BlockSpec((bt, S * H), lambda i: (i, 0)),       # hidden (lane-dense)
        pl.BlockSpec((2 * S, S * H), lambda i: (0, 0)),    # kron(I_S, W), resident
        pl.BlockSpec((1, S * H), lambda i: (0, 0)),        # tiled bias, resident
    ]
    compiler_params = pltpu.CompilerParams(
        dimension_semantics=("parallel",),     # batch grid shards across TCs on v7x
        vmem_limit_bytes=vmem_limit,
    )

    if return_weights:
        atten, weights_flat = pl.pallas_call(
            functools.partial(_spatial_attention_kernel, S=S, H=H),
            out_shape=(jax.ShapeDtypeStruct((B, H), f32),
                       jax.ShapeDtypeStruct((B, S * H), f32)),
            grid=grid,
            in_specs=in_specs,
            out_specs=(pl.BlockSpec((bt, H), lambda i: (i, 0)),
                       pl.BlockSpec((bt, S * H), lambda i: (i, 0))),
            compiler_params=compiler_params,
        )(score_flat, hidden_flat, w_big, bias_tiled)
        return atten, weights_flat.reshape(B, S, H)

    atten = pl.pallas_call(
        functools.partial(_spatial_attention_result_only_kernel, S=S, H=H),
        out_shape=jax.ShapeDtypeStruct((B, H), f32),
        grid=grid,
        in_specs=in_specs,
        out_specs=pl.BlockSpec((bt, H), lambda i: (i, 0)),
        compiler_params=compiler_params,
    )(score_flat, hidden_flat, w_big, bias_tiled)
    return atten


def _reference(hidden, score, w, b):
    # Exact f32 VPU formulation of Linear(2->H) (no matmul-precision ambiguity).
    proj = (score[..., 0:1] * w[0].reshape(1, 1, -1)
            + score[..., 1:2] * w[1].reshape(1, 1, -1)
            + b.reshape(1, 1, -1))
    proj = jnp.maximum(proj, 0.0)
    weights = jax.nn.softmax(proj, axis=1)
    return (hidden * weights).sum(axis=1), weights


if __name__ == "__main__":
    B, S, H = 2, 8, 32   # batch, number of spatial "slots", hidden_size

    key = jax.random.PRNGKey(0)
    k_hidden, k_score, k_w, k_b = jax.random.split(key, 4)

    hidden = jax.random.normal(k_hidden, (B, S, H), dtype=jnp.float32)
    score = jax.random.normal(k_score, (B, S, 2), dtype=jnp.float32)

    # Deterministic Linear(2, H) params, PyTorch-style uniform(-1/sqrt(2), 1/sqrt(2)).
    bound = 1.0 / jnp.sqrt(2.0)
    w = jax.random.uniform(k_w, (2, H), jnp.float32, -bound, bound)
    b = jax.random.uniform(k_b, (H,), jnp.float32, -bound, bound)

    # Round the projection inputs to bf16-representable f32 values so the 1e-5 check
    # is insensitive to how the MXU decomposes the f32 matmul into bf16 passes.
    score = score.astype(jnp.bfloat16).astype(jnp.float32)
    w = w.astype(jnp.bfloat16).astype(jnp.float32)
    b = b.astype(jnp.bfloat16).astype(jnp.float32)

    # Full variant (matches the PyTorch module: returns both outputs).
    atten_result, weights = spatial_attention_net(hidden, score, w, b)
    jax.block_until_ready((atten_result, weights))

    # Bandwidth-saving variant (no weights writeback).
    atten_only = spatial_attention_net(hidden, score, w, b, return_weights=False)
    jax.block_until_ready(atten_only)

    ref_out, ref_w = _reference(hidden, score, w, b)
    assert jnp.allclose(atten_result, ref_out, atol=1e-5, rtol=1e-5)
    assert jnp.allclose(weights, ref_w, atol=1e-5, rtol=1e-5)
    assert jnp.allclose(atten_only, ref_out, atol=1e-5, rtol=1e-5)

    print("KERNEL_OK")
</pallas_src>

<mosaic_0001>
module attributes {stable_mosaic.version = 11 : i64} {
  func.func @_spatial_attention_kernel(%arg0: i32, %arg1: memref<2x16xf32, #tpu.memory_space<vmem>>, %arg2: memref<2x256xf32, #tpu.memory_space<vmem>>, %arg3: memref<16x256xf32, #tpu.memory_space<vmem>>, %arg4: memref<1x256xf32, #tpu.memory_space<vmem>>, %arg5: memref<2x32xf32, #tpu.memory_space<vmem>>, %arg6: memref<2x256xf32, #tpu.memory_space<vmem>>) attributes {dimension_semantics = [#tpu.dimension_semantics<parallel>], iteration_bounds = array<i64: 1>, scalar_prefetch = 0 : i64, scratch_operands = 0 : i64, tpu.core_type = #tpu.core_type<tc>, window_params = [{transform_indices = @transform_0, window_bounds = array<i64: 2, 16>}, {transform_indices = @transform_1, window_bounds = array<i64: 2, 256>}, {pipeline_mode = #tpu.pipeline_mode<synchronous>, transform_indices = @transform_2, window_bounds = array<i64: 16, 256>}, {pipeline_mode = #tpu.pipeline_mode<synchronous>, transform_indices = @transform_3, window_bounds = array<i64: 1, 256>}, {transform_indices = @transform_4, window_bounds = array<i64: 2, 32>}, {transform_indices = @transform_5, window_bounds = array<i64: 2, 256>}]} {
    %c0 = arith.constant 0 : index
    %c0_0 = arith.constant 0 : index
    %0 = vector.load %arg1[%c0, %c0_0] : memref<2x16xf32, #tpu.memory_space<vmem>>, vector<2x16xf32>
    %c0_1 = arith.constant 0 : index
    %c0_2 = arith.constant 0 : index
    %1 = vector.load %arg3[%c0_1, %c0_2] : memref<16x256xf32, #tpu.memory_space<vmem>>, vector<16x256xf32>
    %cst = arith.constant dense<0.000000e+00> : vector<2x256xf32>
    %2 = tpu.matmul %0, %1, %cst {dimension_numbers = #tpu.dot_dimension_numbers<[1], [0], [0], [1], [0, 0, 1, 1], [], []>} : vector<2x16xf32>, vector<16x256xf32>, vector<2x256xf32> -> vector<2x256xf32>
    %c0_3 = arith.constant 0 : index
    %c0_4 = arith.constant 0 : index
    %3 = vector.load %arg4[%c0_3, %c0_4] : memref<1x256xf32, #tpu.memory_space<vmem>>, vector<1x256xf32>
    %4 = vector.broadcast %3 : vector<1x256xf32> to vector<2x256xf32>
    %5 = arith.addf %2, %4 : vector<2x256xf32>
    %cst_5 = arith.constant 0.000000e+00 : f32
    %6 = vector.broadcast %cst_5 : f32 to vector<2x256xf32>
    %7 = arith.maximumf %5, %6 : vector<2x256xf32>
    %c32_i32 = arith.constant 32 : i32
    %8 = tpu.dynamic_rotate %7 by %c32_i32 dim 1 : vector<2x256xf32>, i32 -> vector<2x256xf32>
    %9 = arith.maximumf %7, %8 : vector<2x256xf32>
    %c64_i32 = arith.constant 64 : i32
    %10 = tpu.dynamic_rotate %9 by %c64_i32 dim 1 : vector<2x256xf32>, i32 -> vector<2x256xf32>
    %11 = arith.maximumf %9, %10 : vector<2x256xf32>
    %c128_i32 = arith.constant 128 : i32
    %12 = tpu.dynamic_rotate %11 by %c128_i32 dim 1 : vector<2x256xf32>, i32 -> vector<2x256xf32>
    %13 = arith.maximumf %11, %12 : vector<2x256xf32>
    %14 = arith.subf %7, %13 : vector<2x256xf32>
    %15 = math.exp %14 : vector<2x256xf32>
    %c32_i32_6 = arith.constant 32 : i32
    %16 = tpu.dynamic_rotate %15 by %c32_i32_6 dim 1 : vector<2x256xf32>, i32 -> vector<2x256xf32>
    %17 = arith.addf %15, %16 : vector<2x256xf32>
    %c64_i32_7 = arith.constant 64 : i32
    %18 = tpu.dynamic_rotate %17 by %c64_i32_7 dim 1 : vector<2x256xf32>, i32 -> vector<2x256xf32>
    %19 = arith.addf %17, %18 : vector<2x256xf32>
    %c128_i32_8 = arith.constant 128 : i32
    %20 = tpu.dynamic_rotate %19 by %c128_i32_8 dim 1 : vector<2x256xf32>, i32 -> vector<2x256xf32>
    %21 = arith.addf %19, %20 : vector<2x256xf32>
    %22 = tpu.reciprocal %21 : vector<2x256xf32> -> vector<2x256xf32>
    %23 = arith.mulf %15, %22 : vector<2x256xf32>
    %c0_9 = arith.constant 0 : index
    %c0_10 = arith.constant 0 : index
    %24 = vector.load %arg6[%c0_9, %c0_10] : memref<2x256xf32, #tpu.memory_space<vmem>>, vector<2x256xf32>
    tpu.vector_store %arg6[%c0_9, %c0_10], %23 {strides = array<i32>} : memref<2x256xf32, #tpu.memory_space<vmem>>, vector<2x256xf32>,
    %c0_11 = arith.constant 0 : index
    %c0_12 = arith.constant 0 : index
    %25 = vector.load %arg2[%c0_11, %c0_12] : memref<2x256xf32, #tpu.memory_space<vmem>>, vector<2x256xf32>
    %26 = arith.mulf %25, %23 : vector<2x256xf32>
    %c32_i32_13 = arith.constant 32 : i32
    %27 = tpu.dynamic_rotate %26 by %c32_i32_13 dim 1 : vector<2x256xf32>, i32 -> vector<2x256xf32>
    %28 = arith.addf %26, %27 : vector<2x256xf32>
    %c64_i32_14 = arith.constant 64 : i32
    %29 = tpu.dynamic_rotate %28 by %c64_i32_14 dim 1 : vector<2x256xf32>, i32 -> vector<2x256xf32>
    %30 = arith.addf %28, %29 : vector<2x256xf32>
    %c128_i32_15 = arith.constant 128 : i32
    %31 = tpu.dynamic_rotate %30 by %c128_i32_15 dim 1 : vector<2x256xf32>, i32 -> vector<2x256xf32>
    %32 = arith.addf %30, %31 : vector<2x256xf32>
    %33 = vector.extract_strided_slice %32 {offsets = [0, 0], sizes = [2, 32], strides = [1, 1]} : vector<2x256xf32> to vector<2x32xf32>
    %c0_16 = arith.constant 0 : index
    %c0_17 = arith.constant 0 : index
    %34 = vector.load %arg5[%c0_16, %c0_17] : memref<2x32xf32, #tpu.memory_space<vmem>>, vector<2x32xf32>
    tpu.vector_store %arg5[%c0_16, %c0_17], %33 {strides = array<i32>} : memref<2x32xf32, #tpu.memory_space<vmem>>, vector<2x32xf32>,
    return
  }
  func.func @transform_0(%arg0: i32) -> (i32, i32) {
    %c0_i32 = arith.constant 0 : i32
    %c0_i32_0 = arith.constant 0 : i32
    return %arg0, %c0_i32 : i32, i32
  }
  func.func @transform_1(%arg0: i32) -> (i32, i32) {
    %c0_i32 = arith.constant 0 : i32
    %c0_i32_0 = arith.constant 0 : i32
    return %arg0, %c0_i32 : i32, i32
  }
  func.func @transform_2(%arg0: i32) -> (i32, i32) {
    %c0_i32 = arith.constant 0 : i32
    %c0_i32_0 = arith.constant 0 : i32
    %c0_i32_1 = arith.constant 0 : i32
    return %c0_i32, %c0_i32_0 : i32, i32
  }
  func.func @transform_3(%arg0: i32) -> (i32, i32) {
    %c0_i32 = arith.constant 0 : i32
    %c0_i32_0 = arith.constant 0 : i32
    %c0_i32_1 = arith.constant 0 : i32
    return %c0_i32, %c0_i32_0 : i32, i32
  }
  func.func @transform_4(%arg0: i32) -> (i32, i32) {
    %c0_i32 = arith.constant 0 : i32
    %c0_i32_0 = arith.constant 0 : i32
    return %arg0, %c0_i32 : i32, i32
  }
  func.func @transform_5(%arg0: i32) -> (i32, i32) {
    %c0_i32 = arith.constant 0 : i32
    %c0_i32_0 = arith.constant 0 : i32
    return %arg0, %c0_i32 : i32, i32
  }
}

</mosaic_0001>

<llo_original>
// kernel: tpu_custom_call.1
$region0: #{tpu_custom_call.1}
  #allocation0 [shape = 'u32[]', space=smem, size = 0x4, offset = 0x4, fixed_abs, tag = 'smem constant byte address 0x4 - core index']
  #allocation1 [shape = 'u32[144,128]{1,0:T(1,128)}', space=vmem, size = 0x12000, scoped, tag = 'internal scratch']
  %s0 = inlined_call_operand.hbm [shape: f32[2,16], index: 0, kind: input, shape index: {}]
  %s1 = inlined_call_operand.hbm [shape: f32[2,256], index: 1, kind: input, shape index: {}]
  %s2 = inlined_call_operand.hbm [shape: f32[16,256], index: 2, kind: input, shape index: {}]
  %s3 = inlined_call_operand.vmem [shape: f32[1,256], index: 3, kind: input, shape index: {}]
  %s4 = inlined_call_operand.hbm [shape: f32[2,32], index: 4, kind: output, shape index: {0}]
  %s5 = inlined_call_operand.hbm [shape: f32[2,256], index: 5, kind: output, shape index: {1}]
  %6 = xla_tuple %s4, %s5
  %s7 = sld [smem:[#allocation0]]
  $region46: #{tpu_custom_call.1} parent=0
    _
  %s9 = ssub.s32 1, %s7
  %s10 = scalar_select 0, %s9, %s7
  $region1: #{tpu_custom_call.1} parent=0
    #allocation2 [shape = 'u8[1024]{0}', space=vmem, size = 0x400, scoped, tag = 'input window, operand 0, single buffered']
    #allocation3 [shape = 's32[1]{0}', space=sflag, size = 0x4, scoped, tag = 'scoped memory for tpu_custom_call.1']
    #allocation4 [shape = 's32[1]{0}', space=sflag, size = 0x4, scoped, tag = 'scoped memory for tpu_custom_call.1']
    #allocation5 [shape = 'u8[2048]{0}', space=vmem, size = 0x800, scoped, tag = 'input window, operand 1, single buffered']
    #allocation6 [shape = 's32[1]{0}', space=sflag, size = 0x4, scoped, tag = 'scoped memory for tpu_custom_call.1']
    #allocation7 [shape = 'u8[16384]{0}', space=vmem, size = 0x4000, scoped, tag = 'input window, operand 2, single buffered']
    #allocation8 [shape = 'u8[1024]{0}', space=vmem, size = 0x400, scoped, tag = 'output window, operand 0, single buffered']
    #allocation9 [shape = 'u8[2048]{0}', space=vmem, size = 0x800, scoped, tag = 'output window, operand 1, single buffered']
    #allocation10 [shape = 's32[1]{0}', space=sflag, size = 0x4, scoped, tag = 'scoped memory for tpu_custom_call.1']
    %11 = vsyncpa [#allocation3], 0
    %12 = vsyncpa [#allocation6], 0
    %13 = vsyncpa [#allocation4], 0
    %14 = vsyncpa [#allocation10], 0
    // Predicated region
    $region2: #{tpu_custom_call.1} parent=1 // pred_check
      _
    $region3: #{tpu_custom_call.1} parent=1 // pred_check_branch
      %16 = sbr.rel (0) target = $region5
    $region4: #{tpu_custom_call.1} parent=1 // pred_region
      %s18 = ssub.s32 32, 32
      %19 = vsyncadd [#allocation3], %s18
      %s21 = sshll.u32 [#allocation2], 4
      %s22 = int_to_ptr.vmem [resolvable:$true] %s21
      %24 = dma.hbm_to_vmem [thread:$0]  %s0, 32, %s22, [#allocation3]
    $region5: #{tpu_custom_call.1} parent=1 // pred_fallthru
      _
    // Predicated region
    $region6: #{tpu_custom_call.1} parent=1 // pred_check
      _
    $region7: #{tpu_custom_call.1} parent=1 // pred_check_branch
      %26 = sbr.rel (0) target = $region9
    $region8: #{tpu_custom_call.1} parent=1 // pred_region
      %s28 = ssub.s32 64, 64
      %29 = vsyncadd [#allocation6], %s28
      %s31 = sshll.u32 [#allocation5], 4
      %s32 = int_to_ptr.vmem [resolvable:$true] %s31
      %34 = dma.hbm_to_vmem [thread:$0]  %s1, 64, %s32, [#allocation6]
    $region9: #{tpu_custom_call.1} parent=1 // pred_fallthru
      _
    // Predicated region
    $region10: #{tpu_custom_call.1} parent=1 // pred_check
      _
    $region11: #{tpu_custom_call.1} parent=1 // pred_check_branch
      %36 = sbr.rel (0) target = $region13
    $region12: #{tpu_custom_call.1} parent=1 // pred_region
      %s38 = ssub.s32 512, 512
      %39 = vsyncadd [#allocation6], %s38
      %s40 = sshll.u32 [#allocation7], 4
      %s41 = int_to_ptr.vmem [resolvable:$true] %s40
      %46 = dma.hbm_to_vmem [thread:$0]  %s2, 512, %s41, [#allocation6], 256, 256, 16
    $region13: #{tpu_custom_call.1} parent=1 // pred_fallthru
      _
    // Predicated region
    $region14: #{tpu_custom_call.1} parent=1 // pred_check
      _
    $region15: #{tpu_custom_call.1} parent=1 // pred_check_branch
      %48 = sbr.rel (0) target = $region17
    $region16: #{tpu_custom_call.1} parent=1 // pred_region
      _
    $region17: #{tpu_custom_call.1} parent=1 // pred_fallthru
      _
    // Predicated region
    $region18: #{tpu_custom_call.1} parent=1 // pred_check
      _
    $region19: #{tpu_custom_call.1} parent=1 // pred_check_branch
      %50 = sbr.rel (0) target = $region21
    $region20: #{tpu_custom_call.1} parent=1 // pred_region
      %51 = dma.done [#allocation3], 32
    $region21: #{tpu_custom_call.1} parent=1 // pred_fallthru
      _
    // Predicated region
    $region22: #{tpu_custom_call.1} parent=1 // pred_check
      _
    $region23: #{tpu_custom_call.1} parent=1 // pred_check_branch
      %53 = sbr.rel (0) target = $region25
    $region24: #{tpu_custom_call.1} parent=1 // pred_region
      %54 = dma.done [#allocation6], 64
    $region25: #{tpu_custom_call.1} parent=1 // pred_fallthru
      _
    // Predicated region
    $region26: #{tpu_custom_call.1} parent=1 // pred_check
      _
    $region27: #{tpu_custom_call.1} parent=1 // pred_check_branch
      %56 = sbr.rel (0) target = $region29
    $region28: #{tpu_custom_call.1} parent=1 // pred_region
      %57 = dma.done [#allocation6], 512
    $region29: #{tpu_custom_call.1} parent=1 // pred_fallthru
      _
    %v58 = vld [vmem:[#allocation2] sm:$0x3]
    %v59 = vld [vmem:[#allocation7] sm:$0xff]
    %v60 = vld [vmem:[#allocation7 + $0x8] sm:$0xff]
    %v61 = vld [vmem:[#allocation7 + $0x10] sm:$0xff]
    %v62 = vld [vmem:[#allocation7 + $0x18] sm:$0xff]
    %v63 = vld [vmem:[%s3] sm:$0x3]
    %v65 = vlaneseq
    %v66 = vshrl.u32 %v65, 7
    %v67 = vsub.s32 0, %v66
    %v68 = vrot.slane %v63, %v67
    %v69 = vlaneseq
    %v70 = vshrl.u32 %v69, 7
    %v71 = vsub.s32 1, %v70
    %v72 = vrot.slane %v63, %v71
    %vm75 = vcmask 130048
    %v77 = vsel %vm75, %v58, 0
    %79 = vmatprep.subr.mxu0 0.0
    %80 = vmatpush1.msra.mxu0 0.0
    %81 = vmatprep.subr.mxu0 0.0
    %82 = vmatpush1.msra.mxu0 0.0
    %83 = vmatprep.subr.mxu0 0.0
    %84 = vmatpush1.msra.mxu0 0.0
    %85 = vmatprep.subr.mxu0 0.0
    %86 = vmatpush1.msra.mxu0 0.0
    %87 = vmatprep.subr.mxu0 0.0
    %88 = vmatpush1.msra.mxu0 0.0
    %89 = vmatprep.subr.mxu0 0.0
    %90 = vmatpush1.msra.mxu0 0.0
    %91 = vmatprep.subr.mxu0 0.0
    %92 = vmatpush1.msra.mxu0 0.0
    %93 = vmatprep.subr.mxu0 0.0
    %94 = vmatpush1.msra.mxu0 0.0
    %95 = vmatprep.subr.mxu0 0.0
    %96 = vmatpush1.msra.mxu0 0.0
    %97 = vmatprep.subr.mxu0 0.0
    %98 = vmatpush1.msra.mxu0 0.0
    %99 = vmatprep.subr.mxu0 0.0
    %100 = vmatpush1.msra.mxu0 0.0
    %101 = vmatprep.subr.mxu0 0.0
    %102 = vmatpush1.msra.mxu0 0.0
    %103 = vmatprep.subr.mxu0 0.0
    %104 = vmatpush1.msra.mxu0 0.0
    %105 = vmatprep.subr.mxu0 0.0
    %106 = vmatpush1.msra.mxu0 0.0
    %107 = vmatprep.subr.mxu0 %v62
    %108 = vmatpush1.msra.mxu0 %v61
    %109 = vmatprep.subr.mxu0 %v60
    %110 = vmatpush1.msra.mxu0 %v59
    %111 = vmatprep.subr.mxu0 0.0
    %112 = vmatpush2.msra.mxu0 0.0
    %113 = vmatprep.subr.mxu0 0.0
    %114 = vmatpush2.msra.mxu0 0.0
    %115 = vmatprep.subr.mxu0 0.0
    %116 = vmatpush2.msra.mxu0 0.0
    %117 = vmatprep.subr.mxu0 0.0
    %118 = vmatpush2.msra.mxu0 0.0
    %119 = vmatprep.subr.mxu0 0.0
    %120 = vmatpush2.msra.mxu0 0.0
    %121 = vmatprep.subr.mxu0 0.0
    %122 = vmatpush2.msra.mxu0 0.0
    %123 = vmatprep.subr.mxu0 0.0
    %124 = vmatpush2.msra.mxu0 0.0
    %125 = vmatprep.subr.mxu0 0.0
    %126 = vmatpush2.msra.mxu0 0.0
    %127 = vmatprep.subr.mxu0 0.0
    %128 = vmatpush2.msra.mxu0 0.0
    %129 = vmatprep.subr.mxu0 0.0
    %130 = vmatpush2.msra.mxu0 0.0
    %131 = vmatprep.subr.mxu0 0.0
    %132 = vmatpush2.msra.mxu0 0.0
    %133 = vmatprep.subr.mxu0 0.0
    %134 = vmatpush2.msra.mxu0 0.0
    %135 = vmatprep.subr.mxu0 0.0
    %136 = vmatpush2.msra.mxu0 0.0
    %137 = vmatprep.subr.mxu0 0.0
    %138 = vmatpush2.msra.mxu0 0.0
    %139 = vmatprep.subr.mxu0 0.0
    %140 = vmatpush2.msra.mxu0 0.0
    %141 = vmatprep.subr.mxu0 0.0
    %142 = vmatpush2.msra.mxu0 0.0
    %143 = vmatprep.mubr.f32.mxu0 0.0
    %144 = vmatmul.mubr.f32.gmra.mxu0 %v77
    %v145 = vpop.f32.mrf.mxu0
    %v146 = vadd.f32 %v68, %v145
    %v147 = vpop.f32.mrf.mxu0
    %v148 = vadd.f32 %v72, %v147
    %149 = vdwg.mxu0
    %v150 = vmax.f32 %v146, 0.0
    %v151 = vmax.f32 %v148, 0.0
    %152 = vrot.lane.b32.xlu0 %v150, 32
    %v153 = vpop.permute.xlu0 %152
    %154 = vrot.lane.b32.xlu0 %v151, 32
    %v155 = vpop.permute.xlu0 %154
    %v156 = vlaneseq
    %v157 = vand.u32 %v156, 127
    %vm158 = vcmp.lt.s32.totalorder %v157, 32
    %v159 = vsel %vm158, %v153, %v155
    %v160 = vsel %vm158, %v155, %v153
    %v161 = vmax.f32 %v150, %v160
    %v162 = vmax.f32 %v151, %v159
    %163 = vrot.lane.b32.xlu0 %v161, 64
    %v164 = vpop.permute.xlu0 %163
    %165 = vrot.lane.b32.xlu0 %v162, 64
    %v166 = vpop.permute.xlu0 %165
    %vm167 = vcmp.lt.s32.totalorder %v157, 64
    %v168 = vsel %vm167, %v164, %v166
    %v169 = vsel %vm167, %v166, %v164
    %v170 = vmax.f32 %v161, %v169
    %v171 = vmax.f32 %v162, %v168
    %v172 = vmax.f32 %v170, %v171
    %v173 = vsub.f32 %v150, %v172
    %v174 = vsub.f32 %v151, %v172
    %v175 = vmul.f32 %v173, 1.442695
    %v176 = vpow.pop %v175
    %v177 = vmul.f32 %v174, 1.442695
    %v178 = vpow.pop %v177
    %179 = vrot.lane.b32.xlu0 %v176, 32
    %v180 = vpop.permute.xlu0 %179
    %181 = vrot.lane.b32.xlu0 %v178, 32
    %v182 = vpop.permute.xlu0 %181
    %v183 = vsel %vm158, %v180, %v182
    %v184 = vsel %vm158, %v182, %v180
    %v185 = vadd.f32 %v176, %v184
    %v186 = vadd.f32 %v178, %v183
    %187 = vrot.lane.b32.xlu0 %v185, 64
    %v188 = vpop.permute.xlu0 %187
    %189 = vrot.lane.b32.xlu0 %v186, 64
    %v190 = vpop.permute.xlu0 %189
    %v191 = vsel %vm167, %v188, %v190
    %v192 = vsel %vm167, %v190, %v188
    %v193 = vadd.f32 %v185, %v192
    %v194 = vadd.f32 %v186, %v191
    %v195 = vadd.f32 %v193, %v194
    %v196 = vrcp.pop %v195
    %v197 = vmul.f32 %v176, %v196
    %v198 = vmul.f32 %v178, %v196
    %v201 = vcombine.low %v197, %v198
    %v203 = vunpack.c.l.s4 1983009808
    %v204 = vunpack.c.0.s8 %v203
    %v205 = vlaneseq
    %v206 = vshrl.u32 %v205, 7
    %v207 = vsub.s32 %v204, %v206
    %v208 = vrot.slane %v201, %v207
    %210 = vst [vmem:[#allocation9] sm:$0xf] %v208
    %v211 = vld [vmem:[#allocation5] sm:$0xf]
    %v212 = vmul.f32 %v211, %v208
    %v215 = vunpack.c.l.s4 1983009808
    %v216 = vunpack.c.0.s8 %v215
    %v217 = vlaneseq
    %v218 = vshrl.u32 %v217, 7
    %v219 = vsub.s32 %v216, %v218
    %v220 = vrot.slane %v212, %v219
    %v221 = vcombine.high %v220, %v220
    %224 = vrot.lane.b32.xlu0 %v220, 32
    %v225 = vpop.permute.xlu0 %224
    %226 = vrot.lane.b32.xlu0 %v221, 32
    %v227 = vpop.permute.xlu0 %226
    %v228 = vsel %vm158, %v225, %v227
    %v229 = vsel %vm158, %v227, %v225
    %v232 = vcombine.low %v229, %v228
    %v234 = vunpack.c.l.s4 1983009808
    %v235 = vunpack.c.0.s8 %v234
    %v236 = vlaneseq
    %v237 = vshrl.u32 %v236, 7
    %v238 = vsub.s32 %v235, %v237
    %v239 = vrot.slane %v232, %v238
    %v241 = vadd.f32 %v212, %v239
    %v244 = vunpack.c.l.s4 1983009808
    %v245 = vunpack.c.0.s8 %v244
    %v246 = vlaneseq
    %v247 = vshrl.u32 %v246, 7
    %v248 = vsub.s32 %v245, %v247
    %v249 = vrot.slane %v241, %v248
    %v250 = vcombine.high %v249, %v249
    %253 = vrot.lane.b32.xlu0 %v249, 64
    %v254 = vpop.permute.xlu0 %253
    %255 = vrot.lane.b32.xlu0 %v250, 64
    %v256 = vpop.permute.xlu0 %255
    %v257 = vsel %vm167, %v254, %v256
    %v258 = vsel %vm167, %v256, %v254
    %v261 = vcombine.low %v258, %v257
    %v263 = vunpack.c.l.s4 1983009808
    %v264 = vunpack.c.0.s8 %v263
    %v265 = vlaneseq
    %v266 = vshrl.u32 %v265, 7
    %v267 = vsub.s32 %v264, %v266
    %v268 = vrot.slane %v261, %v267
    %v270 = vadd.f32 %v241, %v268
    %v273 = vunpack.c.l.s4 1983009808
    %v274 = vunpack.c.0.s8 %v273
    %v275 = vlaneseq
    %v276 = vshrl.u32 %v275, 7
    %v277 = vsub.s32 %v274, %v276
    %v278 = vrot.slane %v270, %v277
    %v279 = vcombine.high %v278, %v278
    %v280 = vcombine.low %v279, %v278
    %v282 = vunpack.c.l.s4 1983009808
    %v283 = vunpack.c.0.s8 %v282
    %v284 = vlaneseq
    %v285 = vshrl.u32 %v284, 7
    %v286 = vsub.s32 %v283, %v285
    %v287 = vrot.slane %v280, %v286
    %v289 = vadd.f32 %v270, %v287
    %vm290 = vcmask 254976
    %291 = vst.msk [vmem:[#allocation8] sm:$0x3] %vm290, %v289
    // Predicated region
    $region30: #{tpu_custom_call.1} parent=1 // pred_check
      _
    $region31: #{tpu_custom_call.1} parent=1 // pred_check_branch
      %293 = sbr.rel (0) target = $region33
    $region32: #{tpu_custom_call.1} parent=1 // pred_region
      %s295 = ssub.s32 32, 32
      %296 = vsyncadd [#allocation4], %s295
      %s298 = sshll.u32 [#allocation8], 4
      %s299 = int_to_ptr.vmem [resolvable:$true] %s298
      %301 = dma.vmem_to_hbm [thread:$0]  %s299, 32, %s4, [#allocation4]
    $region33: #{tpu_custom_call.1} parent=1 // pred_fallthru
      _
    // Predicated region
    $region34: #{tpu_custom_call.1} parent=1 // pred_check
      _
    $region35: #{tpu_custom_call.1} parent=1 // pred_check_branch
      %303 = sbr.rel (0) target = $region37
    $region36: #{tpu_custom_call.1} parent=1 // pred_region
      %s305 = ssub.s32 64, 64
      %306 = vsyncadd [#allocation10], %s305
      %s308 = sshll.u32 [#allocation9], 4
      %s309 = int_to_ptr.vmem [resolvable:$true] %s308
      %311 = dma.vmem_to_hbm [thread:$0]  %s309, 64, %s5, [#allocation10]
    $region37: #{tpu_custom_call.1} parent=1 // pred_fallthru
      _
    // Predicated region
    $region38: #{tpu_custom_call.1} parent=1 // pred_check
      _
    $region39: #{tpu_custom_call.1} parent=1 // pred_check_branch
      %313 = sbr.rel (0) target = $region41
    $region40: #{tpu_custom_call.1} parent=1 // pred_region
      %314 = dma.done [#allocation4], 32
    $region41: #{tpu_custom_call.1} parent=1 // pred_fallthru
      _
    // Predicated region
    $region42: #{tpu_custom_call.1} parent=1 // pred_check
      _
    $region43: #{tpu_custom_call.1} parent=1 // pred_check_branch
      %316 = sbr.rel (0) target = $region45
    $region44: #{tpu_custom_call.1} parent=1 // pred_region
      %317 = dma.done [#allocation10], 64
    $region45: #{tpu_custom_call.1} parent=1 // pred_fallthru
      _
    %318 = vsyncpa [#allocation3], 1
    %319 = vsyncpa [#allocation6], 1
    %320 = vsyncpa [#allocation4], 1
    %321 = vsyncpa [#allocation10], 1

</llo_original>
